<compile_context>
chip_gen: v7x
topology: tpu7x:2x2x1
jax: 0.10.0
libtpu: 0.0.40
codegen_flags: <defaults>
</compile_context>

<pallas_src>
import jax
import jax.numpy as jnp
from jax.experimental import pallas as pl
from jax.experimental.pallas import tpu as pltpu


def _rectified_flow_kernel(
    x_ref, w1_ref, b1_ref, w2_ref, b2_ref, w3_ref, b3_ref, scale_ref, z_ref
):
    x = x_ref[...]
    x_f32 = x.astype(jnp.float32)

    # Layer 1: Linear(D -> H) + ReLU
    h = jnp.dot(x, w1_ref[...], preferred_element_type=jnp.float32) + b1_ref[...]
    h = jnp.maximum(h, 0.0)
    # Layer 2: Linear(H -> H) + ReLU
    h = jnp.dot(h, w2_ref[...], preferred_element_type=jnp.float32) + b2_ref[...]
    h = jnp.maximum(h, 0.0)
    # Layer 3: Linear(H -> D)  => velocity v
    v = jnp.dot(h, w3_ref[...], preferred_element_type=jnp.float32) + b3_ref[...]

    # Residual rectified-flow update: z = x + scale * v   (scale read from SMEM)
    scale = scale_ref[0]
    z_ref[...] = (x_f32 + scale * v).astype(z_ref.dtype)


def rectified_flow_forward(x, w1, b1, w2, b2, w3, b3, scale, *, block_rows=512):
    """Pallas implementation of RectifiedFlow.forward (eval mode).

    Returns (z, log_det) with z = x + scale * MLP(x) and log_det = zeros(batch).
    """
    B, D = x.shape
    H = w1.shape[1]

    # Biases as (1, H)/(1, D) rows so they broadcast against (TM, H)/(TM, D) tiles.
    b1_2d = b1.reshape(1, H).astype(jnp.float32)
    b2_2d = b2.reshape(1, H).astype(jnp.float32)
    b3_2d = b3.reshape(1, D).astype(jnp.float32)
    scale_1d = jnp.asarray(scale, dtype=jnp.float32).reshape(1)

    # Row tiling: clamp the tile to the sublane-rounded batch (so a small batch does
    # not force a huge padded tile), then pad the batch up to a multiple of the tile
    # so every grid block is full.
    TM = max(8, min(block_rows, ((B + 7) // 8) * 8))
    B_pad = pl.cdiv(B, TM) * TM
    x_p = x if B_pad == B else jnp.pad(x, ((0, B_pad - B), (0, 0)))
    grid = (B_pad // TM,)

    z_p = pl.pallas_call(
        _rectified_flow_kernel,
        out_shape=jax.ShapeDtypeStruct((B_pad, D), x.dtype),
        grid_spec=pltpu.PrefetchScalarGridSpec(
            num_scalar_prefetch=0,
            grid=grid,
            in_specs=[
                pl.BlockSpec((TM, D), lambda i: (i, 0)),   # x row-tile (pipelined)
                pl.BlockSpec((D, H), lambda i: (0, 0)),    # w1 (VMEM-resident)
                pl.BlockSpec((1, H), lambda i: (0, 0)),    # b1
                pl.BlockSpec((H, H), lambda i: (0, 0)),    # w2
                pl.BlockSpec((1, H), lambda i: (0, 0)),    # b2
                pl.BlockSpec((H, D), lambda i: (0, 0)),    # w3
                pl.BlockSpec((1, D), lambda i: (0, 0)),    # b3
                pl.BlockSpec(memory_space=pltpu.MemorySpace.SMEM),  # scale scalar
            ],
            out_specs=pl.BlockSpec((TM, D), lambda i: (i, 0)),
        ),
        compiler_params=pltpu.CompilerParams(
            dimension_semantics=("parallel",),
        ),
    )(x_p, w1, b1_2d, w2, b2_2d, w3, b3_2d, scale_1d)

    z = z_p[:B] if B_pad != B else z_p

    # Eval-mode log-determinant is exactly zeros(batch).
    # TODO(synk): training-mode Hutchinson trace estimator needs autograd JVPs
    # (torch.autograd.grad); it has no clean single-kernel Pallas equivalent here.
    log_det = jnp.zeros((B,), dtype=jnp.float32)
    return z, log_det


if __name__ == "__main__":
    key = jax.random.PRNGKey(0)
    B, D, H = 256, 32, 16  # batch, input_dim, hidden_dim (module default hidden_dim=16)
    ks = jax.random.split(key, 8)

    x = jax.random.normal(ks[0], (B, D), dtype=jnp.float32)
    w1 = jax.random.normal(ks[1], (D, H), dtype=jnp.float32) * 0.1
    b1 = jax.random.normal(ks[2], (H,), dtype=jnp.float32) * 0.01
    w2 = jax.random.normal(ks[3], (H, H), dtype=jnp.float32) * 0.1
    b2 = jax.random.normal(ks[4], (H,), dtype=jnp.float32) * 0.01
    w3 = jax.random.normal(ks[5], (H, D), dtype=jnp.float32) * 0.1
    b3 = jax.random.normal(ks[6], (D,), dtype=jnp.float32) * 0.01
    scale = jnp.full((1,), 0.1, dtype=jnp.float32)  # nn.Parameter(torch.ones(1) * 0.1)

    # Run with a small row tile so the test actually exercises a multi-step grid.
    z, log_det = rectified_flow_forward(
        x, w1, b1, w2, b2, w3, b3, scale, block_rows=128
    )
    jax.block_until_ready((z, log_det))

    # Pure-JAX reference.
    h1 = jnp.maximum(x @ w1 + b1, 0.0)
    h2 = jnp.maximum(h1 @ w2 + b2, 0.0)
    v_ref = h2 @ w3 + b3
    z_ref = x + scale[0] * v_ref

    assert z.shape == x.shape and z.dtype == x.dtype
    assert log_det.shape == (B,)
    assert bool(jnp.allclose(z, z_ref, atol=1e-5, rtol=1e-5))
    assert bool(jnp.all(log_det == 0.0))

    print("KERNEL_OK")
</pallas_src>

<mosaic_0001>
module attributes {stable_mosaic.version = 11 : i64} {
  func.func @_rectified_flow_kernel(%arg0: i32, %arg1: memref<128x32xf32, #tpu.memory_space<vmem>>, %arg2: memref<32x16xf32, #tpu.memory_space<vmem>>, %arg3: memref<1x16xf32, #tpu.memory_space<vmem>>, %arg4: memref<16x16xf32, #tpu.memory_space<vmem>>, %arg5: memref<1x16xf32, #tpu.memory_space<vmem>>, %arg6: memref<16x32xf32, #tpu.memory_space<vmem>>, %arg7: memref<1x32xf32, #tpu.memory_space<vmem>>, %arg8: memref<1xf32, #tpu.memory_space<smem>>, %arg9: memref<128x32xf32, #tpu.memory_space<vmem>>) attributes {dimension_semantics = [#tpu.dimension_semantics<parallel>], iteration_bounds = array<i64: 2>, scalar_prefetch = 0 : i64, scratch_operands = 0 : i64, tpu.core_type = #tpu.core_type<tc>, window_params = [{transform_indices = @transform_0, window_bounds = array<i64: 128, 32>}, {pipeline_mode = #tpu.pipeline_mode<synchronous>, transform_indices = @transform_1, window_bounds = array<i64: 32, 16>}, {pipeline_mode = #tpu.pipeline_mode<synchronous>, transform_indices = @transform_2, window_bounds = array<i64: 1, 16>}, {pipeline_mode = #tpu.pipeline_mode<synchronous>, transform_indices = @transform_3, window_bounds = array<i64: 16, 16>}, {pipeline_mode = #tpu.pipeline_mode<synchronous>, transform_indices = @transform_4, window_bounds = array<i64: 1, 16>}, {pipeline_mode = #tpu.pipeline_mode<synchronous>, transform_indices = @transform_5, window_bounds = array<i64: 16, 32>}, {pipeline_mode = #tpu.pipeline_mode<synchronous>, transform_indices = @transform_6, window_bounds = array<i64: 1, 32>}, {transform_indices = @transform_7, window_bounds = array<i64: 1>}, {transform_indices = @transform_8, window_bounds = array<i64: 128, 32>}]} {
    %c0 = arith.constant 0 : index
    %c0_0 = arith.constant 0 : index
    %0 = vector.load %arg1[%c0, %c0_0] : memref<128x32xf32, #tpu.memory_space<vmem>>, vector<128x32xf32>
    %c0_1 = arith.constant 0 : index
    %c0_2 = arith.constant 0 : index
    %1 = vector.load %arg2[%c0_1, %c0_2] : memref<32x16xf32, #tpu.memory_space<vmem>>, vector<32x16xf32>
    %cst = arith.constant dense<0.000000e+00> : vector<128x16xf32>
    %2 = tpu.matmul %0, %1, %cst {dimension_numbers = #tpu.dot_dimension_numbers<[1], [0], [0], [1], [0, 0, 1, 1], [], []>} : vector<128x32xf32>, vector<32x16xf32>, vector<128x16xf32> -> vector<128x16xf32>
    %c0_3 = arith.constant 0 : index
    %c0_4 = arith.constant 0 : index
    %3 = vector.load %arg3[%c0_3, %c0_4] : memref<1x16xf32, #tpu.memory_space<vmem>>, vector<1x16xf32>
    %4 = vector.broadcast %3 : vector<1x16xf32> to vector<128x16xf32>
    %5 = arith.addf %2, %4 : vector<128x16xf32>
    %cst_5 = arith.constant 0.000000e+00 : f32
    %6 = vector.broadcast %cst_5 : f32 to vector<128x16xf32>
    %7 = arith.maximumf %5, %6 : vector<128x16xf32>
    %c0_6 = arith.constant 0 : index
    %c0_7 = arith.constant 0 : index
    %8 = vector.load %arg4[%c0_6, %c0_7] : memref<16x16xf32, #tpu.memory_space<vmem>>, vector<16x16xf32>
    %cst_8 = arith.constant dense<0.000000e+00> : vector<128x16xf32>
    %9 = tpu.matmul %7, %8, %cst_8 {dimension_numbers = #tpu.dot_dimension_numbers<[1], [0], [0], [1], [0, 0, 1, 1], [], []>} : vector<128x16xf32>, vector<16x16xf32>, vector<128x16xf32> -> vector<128x16xf32>
    %c0_9 = arith.constant 0 : index
    %c0_10 = arith.constant 0 : index
    %10 = vector.load %arg5[%c0_9, %c0_10] : memref<1x16xf32, #tpu.memory_space<vmem>>, vector<1x16xf32>
    %11 = vector.broadcast %10 : vector<1x16xf32> to vector<128x16xf32>
    %12 = arith.addf %9, %11 : vector<128x16xf32>
    %cst_11 = arith.constant 0.000000e+00 : f32
    %13 = vector.broadcast %cst_11 : f32 to vector<128x16xf32>
    %14 = arith.maximumf %12, %13 : vector<128x16xf32>
    %c0_12 = arith.constant 0 : index
    %c0_13 = arith.constant 0 : index
    %15 = vector.load %arg6[%c0_12, %c0_13] : memref<16x32xf32, #tpu.memory_space<vmem>>, vector<16x32xf32>
    %cst_14 = arith.constant dense<0.000000e+00> : vector<128x32xf32>
    %16 = tpu.matmul %14, %15, %cst_14 {dimension_numbers = #tpu.dot_dimension_numbers<[1], [0], [0], [1], [0, 0, 1, 1], [], []>} : vector<128x16xf32>, vector<16x32xf32>, vector<128x32xf32> -> vector<128x32xf32>
    %c0_15 = arith.constant 0 : index
    %c0_16 = arith.constant 0 : index
    %17 = vector.load %arg7[%c0_15, %c0_16] : memref<1x32xf32, #tpu.memory_space<vmem>>, vector<1x32xf32>
    %18 = vector.broadcast %17 : vector<1x32xf32> to vector<128x32xf32>
    %19 = arith.addf %16, %18 : vector<128x32xf32>
    %c0_17 = arith.constant 0 : index
    %20 = memref.load %arg8[%c0_17] : memref<1xf32, #tpu.memory_space<smem>>
    %21 = vector.broadcast %20 : f32 to vector<128x32xf32>
    %22 = arith.mulf %21, %19 : vector<128x32xf32>
    %23 = arith.addf %0, %22 : vector<128x32xf32>
    %c0_18 = arith.constant 0 : index
    %c0_19 = arith.constant 0 : index
    %24 = vector.load %arg9[%c0_18, %c0_19] : memref<128x32xf32, #tpu.memory_space<vmem>>, vector<128x32xf32>
    tpu.vector_store %arg9[%c0_18, %c0_19], %23 {strides = array<i32>} : memref<128x32xf32, #tpu.memory_space<vmem>>, vector<128x32xf32>,
    return
  }
  func.func @transform_0(%arg0: i32) -> (i32, i32) {
    %c0_i32 = arith.constant 0 : i32
    %c0_i32_0 = arith.constant 0 : i32
    return %arg0, %c0_i32 : i32, i32
  }
  func.func @transform_1(%arg0: i32) -> (i32, i32) {
    %c0_i32 = arith.constant 0 : i32
    %c0_i32_0 = arith.constant 0 : i32
    %c0_i32_1 = arith.constant 0 : i32
    return %c0_i32, %c0_i32_0 : i32, i32
  }
  func.func @transform_2(%arg0: i32) -> (i32, i32) {
    %c0_i32 = arith.constant 0 : i32
    %c0_i32_0 = arith.constant 0 : i32
    %c0_i32_1 = arith.constant 0 : i32
    return %c0_i32, %c0_i32_0 : i32, i32
  }
  func.func @transform_3(%arg0: i32) -> (i32, i32) {
    %c0_i32 = arith.constant 0 : i32
    %c0_i32_0 = arith.constant 0 : i32
    %c0_i32_1 = arith.constant 0 : i32
    return %c0_i32, %c0_i32_0 : i32, i32
  }
  func.func @transform_4(%arg0: i32) -> (i32, i32) {
    %c0_i32 = arith.constant 0 : i32
    %c0_i32_0 = arith.constant 0 : i32
    %c0_i32_1 = arith.constant 0 : i32
    return %c0_i32, %c0_i32_0 : i32, i32
  }
  func.func @transform_5(%arg0: i32) -> (i32, i32) {
    %c0_i32 = arith.constant 0 : i32
    %c0_i32_0 = arith.constant 0 : i32
    %c0_i32_1 = arith.constant 0 : i32
    return %c0_i32, %c0_i32_0 : i32, i32
  }
  func.func @transform_6(%arg0: i32) -> (i32, i32) {
    %c0_i32 = arith.constant 0 : i32
    %c0_i32_0 = arith.constant 0 : i32
    %c0_i32_1 = arith.constant 0 : i32
    return %c0_i32, %c0_i32_0 : i32, i32
  }
  func.func @transform_7(%arg0: i32) -> i32 {
    %c0_i32 = arith.constant 0 : i32
    %c0_i32_0 = arith.constant 0 : i32
    return %c0_i32 : i32
  }
  func.func @transform_8(%arg0: i32) -> (i32, i32) {
    %c0_i32 = arith.constant 0 : i32
    %c0_i32_0 = arith.constant 0 : i32
    return %arg0, %c0_i32 : i32, i32
  }
}

</mosaic_0001>

<llo_original>
// kernel: tpu_custom_call.1
$region0: #{tpu_custom_call.1}
  #allocation0 [shape = 'u32[]', space=smem, size = 0x4, offset = 0x4, fixed_abs, tag = 'smem constant byte address 0x4 - core index']
  #allocation1 [shape = 'u32[144,128]{1,0:T(1,128)}', space=vmem, size = 0x12000, scoped, tag = 'internal scratch']
  #allocation2 [shape = 'f32[1]{0:T(128)S(6)}', space=smem, size = 0x200, scoped, tag = 'scoped memory for tpu_custom_call.1']
  %s0 = inlined_call_operand.vmem [shape: f32[256,32], index: 0, kind: input, shape index: {}]
  %s1 = inlined_call_operand.vmem [shape: f32[32,16], index: 1, kind: input, shape index: {}]
  %s2 = inlined_call_operand.vmem [shape: f32[1,16], index: 2, kind: input, shape index: {}]
  %s3 = inlined_call_operand.vmem [shape: f32[16,16], index: 3, kind: input, shape index: {}]
  %s4 = inlined_call_operand.vmem [shape: f32[1,16], index: 4, kind: input, shape index: {}]
  %s5 = inlined_call_operand.vmem [shape: f32[16,32], index: 5, kind: input, shape index: {}]
  %s6 = inlined_call_operand.vmem [shape: f32[1,32], index: 6, kind: input, shape index: {}]
  %s7 = inlined_call_operand.<no memory space> [shape: f32[1], index: 7, kind: input, shape index: {}]
  %s8 = inlined_call_operand.vmem [shape: f32[256,32], index: 8, kind: output, shape index: {}]
  %s9 = sld [smem:[#allocation0]]
  $region65: #{tpu_custom_call.1} parent=0
    _
  %s11 = ssub.s32 1, %s9
  %s12 = scalar_select 0, %s11, %s9
  %13 = sst [smem:[#allocation2]] %s7
  loop: start=0, step=1, limit=4
  $region2: #{tpu_custom_call.1} parent=0 // loop_pre_header
    _
  $region3: #{tpu_custom_call.1} parent=0 // loop_header
    %s15 = sphi 0, %s19
    %p16 = scmp.ge.s32.totalorder %s15, 4
    %s25 = sphi 0, %s27
    %s28 = sphi 0, %s25
    %s29 = sphi 0, %s28
    %s45 = sphi 0, %s29
    %s49 = sphi 0, %s49
    %s51 = sphi 0, %s49
    %s52 = sphi 0, %s51
    %s66 = sphi 0, %s52
    %s70 = sphi 0, %s70
    %s72 = sphi 0, %s70
    %s73 = sphi 0, %s72
    %s87 = sphi 0, %s73
    %s91 = sphi 0, %s91
    %s93 = sphi 0, %s91
    %s94 = sphi 0, %s93
    %s108 = sphi 0, %s94
    %s112 = sphi 0, %s112
    %s114 = sphi 0, %s112
    %s115 = sphi 0, %s114
    %s129 = sphi 0, %s115
    %s133 = sphi 0, %s133
    %s135 = sphi 0, %s133
    %s136 = sphi 0, %s135
    %s150 = sphi 0, %s136
    %s154 = sphi 0, %s154
    %s156 = sphi 0, %s154
    %s157 = sphi 0, %s156
    %s171 = sphi 0, %s157
    %s175 = sphi 0, %s175
    %s177 = sphi 0, %s175
    %s178 = sphi 0, %s177
    %s192 = sphi 0, %s178
    %s198 = sphi 0, %s200
    %s201 = sphi 0, %s198
    %s202 = sphi 0, %s201
    %s218 = sphi 0, %s202
  $region4: #{tpu_custom_call.1} parent=0 // loop_header_branch
    %18 = sbr.rel (%p16) target = $region8
  $region5: #{tpu_custom_call.1} parent=0 // loop_body
    %s20 = ssub.s32 %s15, 1
    %s21 = ssub.s32 %s15, 2
    %s22 = sadd.s32 %s15, 1
    %s23 = ssub.s32 %s15, %s22
    %p24 = scmp.eq.s32.totalorder %s23, 0
    %s26 = sadd.s32 %s25, 1
    %s27 = scalar_select %p24, %s25, %s26
    %p30 = pneg %p24
    %p31 = scmp.eq.s32.totalorder %s15, 1
    %p32 = por %p30, %p31
    %p33 = scmp.ne.s32.totalorder %s25, %s28
    %p34 = scmp.eq.s32.totalorder %s15, 0
    %p35 = por %p33, %p34
    %p36 = scmp.ne.s32.totalorder %s25, %s28
    %p37 = scmp.eq.s32.totalorder %s20, 1
    %p38 = por %p36, %p37
    %p39 = scmp.ne.s32.totalorder %s28, %s29
    %p40 = scmp.eq.s32.totalorder %s20, 0
    %p41 = por %p39, %p40
    %p42 = scmp.ne.s32.totalorder %s28, %s29
    %p43 = scmp.eq.s32.totalorder %s21, 1
    %p44 = por %p42, %p43
    %p46 = scmp.ne.s32.totalorder %s29, %s45
    %p47 = scmp.eq.s32.totalorder %s21, 0
    %p48 = por %p46, %p47
    %s50 = sadd.s32 %s49, 1
    %p53 = scmp.eq.s32.totalorder %s15, 1
    %p54 = scmp.ne.s32.totalorder %s49, %s51
    %p55 = scmp.eq.s32.totalorder %s15, 0
    %p56 = por %p54, %p55
    %p57 = scmp.ne.s32.totalorder %s49, %s51
    %p58 = scmp.eq.s32.totalorder %s20, 1
    %p59 = por %p57, %p58
    %p60 = scmp.ne.s32.totalorder %s51, %s52
    %p61 = scmp.eq.s32.totalorder %s20, 0
    %p62 = por %p60, %p61
    %p63 = scmp.ne.s32.totalorder %s51, %s52
    %p64 = scmp.eq.s32.totalorder %s21, 1
    %p65 = por %p63, %p64
    %p67 = scmp.ne.s32.totalorder %s52, %s66
    %p68 = scmp.eq.s32.totalorder %s21, 0
    %p69 = por %p67, %p68
    %s71 = sadd.s32 %s70, 1
    %p74 = scmp.eq.s32.totalorder %s15, 1
    %p75 = scmp.ne.s32.totalorder %s70, %s72
    %p76 = scmp.eq.s32.totalorder %s15, 0
    %p77 = por %p75, %p76
    %p78 = scmp.ne.s32.totalorder %s70, %s72
    %p79 = scmp.eq.s32.totalorder %s20, 1
    %p80 = por %p78, %p79
    %p81 = scmp.ne.s32.totalorder %s72, %s73
    %p82 = scmp.eq.s32.totalorder %s20, 0
    %p83 = por %p81, %p82
    %p84 = scmp.ne.s32.totalorder %s72, %s73
    %p85 = scmp.eq.s32.totalorder %s21, 1
    %p86 = por %p84, %p85
    %p88 = scmp.ne.s32.totalorder %s73, %s87
    %p89 = scmp.eq.s32.totalorder %s21, 0
    %p90 = por %p88, %p89
    %s92 = sadd.s32 %s91, 1
    %p95 = scmp.eq.s32.totalorder %s15, 1
    %p96 = scmp.ne.s32.totalorder %s91, %s93
    %p97 = scmp.eq.s32.totalorder %s15, 0
    %p98 = por %p96, %p97
    %p99 = scmp.ne.s32.totalorder %s91, %s93
    %p100 = scmp.eq.s32.totalorder %s20, 1
    %p101 = por %p99, %p100
    %p102 = scmp.ne.s32.totalorder %s93, %s94
    %p103 = scmp.eq.s32.totalorder %s20, 0
    %p104 = por %p102, %p103
    %p105 = scmp.ne.s32.totalorder %s93, %s94
    %p106 = scmp.eq.s32.totalorder %s21, 1
    %p107 = por %p105, %p106
    %p109 = scmp.ne.s32.totalorder %s94, %s108
    %p110 = scmp.eq.s32.totalorder %s21, 0
    %p111 = por %p109, %p110
    %s113 = sadd.s32 %s112, 1
    %p116 = scmp.eq.s32.totalorder %s15, 1
    %p117 = scmp.ne.s32.totalorder %s112, %s114
    %p118 = scmp.eq.s32.totalorder %s15, 0
    %p119 = por %p117, %p118
    %p120 = scmp.ne.s32.totalorder %s112, %s114
    %p121 = scmp.eq.s32.totalorder %s20, 1
    %p122 = por %p120, %p121
    %p123 = scmp.ne.s32.totalorder %s114, %s115
    %p124 = scmp.eq.s32.totalorder %s20, 0
    %p125 = por %p123, %p124
    %p126 = scmp.ne.s32.totalorder %s114, %s115
    %p127 = scmp.eq.s32.totalorder %s21, 1
    %p128 = por %p126, %p127
    %p130 = scmp.ne.s32.totalorder %s115, %s129
    %p131 = scmp.eq.s32.totalorder %s21, 0
    %p132 = por %p130, %p131
    %s134 = sadd.s32 %s133, 1
    %p137 = scmp.eq.s32.totalorder %s15, 1
    %p138 = scmp.ne.s32.totalorder %s133, %s135
    %p139 = scmp.eq.s32.totalorder %s15, 0
    %p140 = por %p138, %p139
    %p141 = scmp.ne.s32.totalorder %s133, %s135
    %p142 = scmp.eq.s32.totalorder %s20, 1
    %p143 = por %p141, %p142
    %p144 = scmp.ne.s32.totalorder %s135, %s136
    %p145 = scmp.eq.s32.totalorder %s20, 0
    %p146 = por %p144, %p145
    %p147 = scmp.ne.s32.totalorder %s135, %s136
    %p148 = scmp.eq.s32.totalorder %s21, 1
    %p149 = por %p147, %p148
    %p151 = scmp.ne.s32.totalorder %s136, %s150
    %p152 = scmp.eq.s32.totalorder %s21, 0
    %p153 = por %p151, %p152
    %s155 = sadd.s32 %s154, 1
    %p158 = scmp.eq.s32.totalorder %s15, 1
    %p159 = scmp.ne.s32.totalorder %s154, %s156
    %p160 = scmp.eq.s32.totalorder %s15, 0
    %p161 = por %p159, %p160
    %p162 = scmp.ne.s32.totalorder %s154, %s156
    %p163 = scmp.eq.s32.totalorder %s20, 1
    %p164 = por %p162, %p163
    %p165 = scmp.ne.s32.totalorder %s156, %s157
    %p166 = scmp.eq.s32.totalorder %s20, 0
    %p167 = por %p165, %p166
    %p168 = scmp.ne.s32.totalorder %s156, %s157
    %p169 = scmp.eq.s32.totalorder %s21, 1
    %p170 = por %p168, %p169
    %p172 = scmp.ne.s32.totalorder %s157, %s171
    %p173 = scmp.eq.s32.totalorder %s21, 0
    %p174 = por %p172, %p173
    %s176 = sadd.s32 %s175, 1
    %p179 = scmp.eq.s32.totalorder %s15, 1
    %p180 = scmp.ne.s32.totalorder %s175, %s177
    %p181 = scmp.eq.s32.totalorder %s15, 0
    %p182 = por %p180, %p181
    %p183 = scmp.ne.s32.totalorder %s175, %s177
    %p184 = scmp.eq.s32.totalorder %s20, 1
    %p185 = por %p183, %p184
    %p186 = scmp.ne.s32.totalorder %s177, %s178
    %p187 = scmp.eq.s32.totalorder %s20, 0
    %p188 = por %p186, %p187
    %p189 = scmp.ne.s32.totalorder %s177, %s178
    %p190 = scmp.eq.s32.totalorder %s21, 1
    %p191 = por %p189, %p190
    %p193 = scmp.ne.s32.totalorder %s178, %s192
    %p194 = scmp.eq.s32.totalorder %s21, 0
    %p195 = por %p193, %p194
    %s196 = ssub.s32 %s15, %s22
    %p197 = scmp.eq.s32.totalorder %s196, 0
    %s199 = sadd.s32 %s198, 1
    %s200 = scalar_select %p197, %s198, %s199
    %p203 = pneg %p197
    %p204 = scmp.eq.s32.totalorder %s15, 1
    %p205 = por %p203, %p204
    %p206 = scmp.ne.s32.totalorder %s198, %s201
    %p207 = scmp.eq.s32.totalorder %s15, 0
    %p208 = por %p206, %p207
    %p209 = scmp.ne.s32.totalorder %s198, %s201
    %p210 = scmp.eq.s32.totalorder %s20, 1
    %p211 = por %p209, %p210
    %p212 = scmp.ne.s32.totalorder %s201, %s202
    %p213 = scmp.eq.s32.totalorder %s20, 0
    %p214 = por %p212, %p213
    %p215 = scmp.ne.s32.totalorder %s201, %s202
    %p216 = scmp.eq.s32.totalorder %s21, 1
    %p217 = por %p215, %p216
    %p219 = scmp.ne.s32.totalorder %s202, %s218
    %p220 = scmp.eq.s32.totalorder %s21, 0
    %p221 = por %p219, %p220
    %p222 = scmp.le.s32.totalorder 1, %s15
    %p223 = scmp.lt.s32.totalorder %s15, 3
    %p224 = pnand %p222, %p223
    %p225 = pneg %p224
    // Predicated region
    $region9: #{tpu_custom_call.1} parent=5 // pred_check
      _
    $region10: #{tpu_custom_call.1} parent=5 // pred_check_branch
      %227 = sbr.rel (%p224) target = $region12
    $region11: #{tpu_custom_call.1} parent=5 // pred_region
      %s228 = ssub.s32 %s15, 1
      // Predicated region
      $region13: #{tpu_custom_call.1} parent=11 // pred_check
        %p229 = pneg %p62
      $region14: #{tpu_custom_call.1} parent=11 // pred_check_branch
        %231 = sbr.rel (%p229) target = $region16
      $region15: #{tpu_custom_call.1} parent=11 // pred_region
        _
      $region16: #{tpu_custom_call.1} parent=11 // pred_fallthru
        _
      // Predicated region
      $region17: #{tpu_custom_call.1} parent=11 // pred_check
        %p232 = pneg %p83
      $region18: #{tpu_custom_call.1} parent=11 // pred_check_branch
        %234 = sbr.rel (%p232) target = $region20
      $region19: #{tpu_custom_call.1} parent=11 // pred_region
        _
      $region20: #{tpu_custom_call.1} parent=11 // pred_fallthru
        _
      // Predicated region
      $region21: #{tpu_custom_call.1} parent=11 // pred_check
        %p235 = pneg %p104
      $region22: #{tpu_custom_call.1} parent=11 // pred_check_branch
        %237 = sbr.rel (%p235) target = $region24
      $region23: #{tpu_custom_call.1} parent=11 // pred_region
        _
      $region24: #{tpu_custom_call.1} parent=11 // pred_fallthru
        _
      // Predicated region
      $region25: #{tpu_custom_call.1} parent=11 // pred_check
        %p238 = pneg %p125
      $region26: #{tpu_custom_call.1} parent=11 // pred_check_branch
        %240 = sbr.rel (%p238) target = $region28
      $region27: #{tpu_custom_call.1} parent=11 // pred_region
        _
      $region28: #{tpu_custom_call.1} parent=11 // pred_fallthru
        _
      // Predicated region
      $region29: #{tpu_custom_call.1} parent=11 // pred_check
        %p241 = pneg %p146
      $region30: #{tpu_custom_call.1} parent=11 // pred_check_branch
        %243 = sbr.rel (%p241) target = $region32
      $region31: #{tpu_custom_call.1} parent=11 // pred_region
        _
      $region32: #{tpu_custom_call.1} parent=11 // pred_fallthru
        _
      // Predicated region
      $region33: #{tpu_custom_call.1} parent=11 // pred_check
        %p244 = pneg %p167
      $region34: #{tpu_custom_call.1} parent=11 // pred_check_branch
        %246 = sbr.rel (%p244) target = $region36
      $region35: #{tpu_custom_call.1} parent=11 // pred_region
        _
      $region36: #{tpu_custom_call.1} parent=11 // pred_fallthru
        _
      // Predicated region
      $region37: #{tpu_custom_call.1} parent=11 // pred_check
        %p247 = pneg %p188
      $region38: #{tpu_custom_call.1} parent=11 // pred_check_branch
        %249 = sbr.rel (%p247) target = $region40
      $region39: #{tpu_custom_call.1} parent=11 // pred_region
        _
      $region40: #{tpu_custom_call.1} parent=11 // pred_fallthru
        _
    $region12: #{tpu_custom_call.1} parent=5 // pred_fallthru
      _
    %p250 = scmp.lt.s32.totalorder %s15, 2
    // Predicated region
    $region41: #{tpu_custom_call.1} parent=5 // pred_check
      %p251 = pneg %p250
    $region42: #{tpu_custom_call.1} parent=5 // pred_check_branch
      %253 = sbr.rel (%p251) target = $region44
    $region43: #{tpu_custom_call.1} parent=5 // pred_region
      // Predicated region
      $region45: #{tpu_custom_call.1} parent=43 // pred_check
        %p254 = pneg %p35
      $region46: #{tpu_custom_call.1} parent=43 // pred_check_branch
        %256 = sbr.rel (%p254) target = $region48
      $region47: #{tpu_custom_call.1} parent=43 // pred_region
        %s257 = smul.u32 16, %s15
        %p258 = scmp.lt.s32.totalorder %s257, 31
        %s259 = scalar_select %p258, %s257, 31
        %s260 = smul.addr %s259, 8
        %s261 = scalar_lea.vmem %s0, %s260
        %s262 = smul.u32 16, %s15
      $region48: #{tpu_custom_call.1} parent=43 // pred_fallthru
        _
    $region44: #{tpu_custom_call.1} parent=5 // pred_fallthru
      _
    %p263 = scmp.le.s32.totalorder 1, %s15
    %p264 = scmp.lt.s32.totalorder %s15, 3
    %p265 = pnand %p263, %p264
    %p266 = pneg %p265
    // Predicated region
    $region49: #{tpu_custom_call.1} parent=5 // pred_check
      _
    $region50: #{tpu_custom_call.1} parent=5 // pred_check_branch
      %268 = sbr.rel (%p265) target = $region52
    $region51: #{tpu_custom_call.1} parent=5 // pred_region
      %s269 = ssub.s32 %s15, 1
      %s270 = smul.u32 16, %s20
      %p271 = scmp.lt.s32.totalorder %s270, 31
      %s272 = scalar_select %p271, %s270, 31
      %s273 = smul.addr %s272, 8
      %s274 = scalar_lea.vmem %s0, %s273
      %p275 = pneg %p41
      %p276 = pneg %p38
      %p277 = pneg %p62
      %p278 = pneg %p59
      %p279 = pneg %p83
      %p280 = pneg %p80
      %p281 = pneg %p104
      %p282 = pneg %p101
      %p283 = pneg %p125
      %p284 = pneg %p122
      %p285 = pneg %p146
      %p286 = pneg %p143
      %p287 = pneg %p167
      %p288 = pneg %p164
      %p289 = pneg %p188
      %p290 = pneg %p185
      %p291 = pneg %p214
      %p292 = pneg %p211
      %s293 = smul.u32 16, %s20
      %p294 = scmp.lt.s32.totalorder %s293, 31
      %s295 = scalar_select %p294, %s293, 31
      %s296 = smul.addr %s295, 8
      %s297 = scalar_lea.vmem %s8, %s296
      %s298 = smul.u32 16, %s20
      %p299 = scmp.lt.s32.totalorder %s298, 31
      %s300 = scalar_select %p299, %s298, 31
      %s301 = smul.addr %s300, 8
      %s302 = scalar_lea.vmem %s0, %s301
      %s303 = smul.u32 16, %s20
      %s304 = smul.u32 16, %s20
      %p305 = scmp.lt.s32.totalorder %s304, 31
      %s306 = scalar_select %p305, %s304, 31
      %s307 = smul.addr %s306, 8
      %s308 = scalar_lea.vmem %s8, %s307
      %s309 = smul.u32 16, %s20
      %v310 = vld [vmem:[%s302] sm:$0xff]
      %v311 = vld [vmem:[%s302 + $0x8] sm:$0xff]
      %v312 = vld [vmem:[%s302 + $0x10] sm:$0xff]
      %v313 = vld [vmem:[%s302 + $0x18] sm:$0xff]
      %v314 = vld [vmem:[%s302 + $0x20] sm:$0xff]
      %v315 = vld [vmem:[%s302 + $0x28] sm:$0xff]
      %v316 = vld [vmem:[%s302 + $0x30] sm:$0xff]
      %v317 = vld [vmem:[%s302 + $0x38] sm:$0xff]
      %v318 = vld [vmem:[%s302 + $0x40] sm:$0xff]
      %v319 = vld [vmem:[%s302 + $0x48] sm:$0xff]
      %v320 = vld [vmem:[%s302 + $0x50] sm:$0xff]
      %v321 = vld [vmem:[%s302 + $0x58] sm:$0xff]
      %v322 = vld [vmem:[%s302 + $0x60] sm:$0xff]
      %v323 = vld [vmem:[%s302 + $0x68] sm:$0xff]
      %v324 = vld [vmem:[%s302 + $0x70] sm:$0xff]
      %v325 = vld [vmem:[%s302 + $0x78] sm:$0xff]
      %v326 = vld [vmem:[%s1] sm:$0xff]
      %v327 = vld [vmem:[%s1 + $0x8] sm:$0xff]
      %v328 = vld [vmem:[%s1 + $0x10] sm:$0xff]
      %v329 = vld [vmem:[%s1 + $0x18] sm:$0xff]
      %v330 = vld [vmem:[%s2] sm:$0x1]
      %v332 = vlaneseq
      %v333 = vshrl.u32 %v332, 7
      %v334 = vsub.s32 0, %v333
      %v335 = vrot.slane %v330, %v334
      %vm337 = vcmask 261120
      %v339 = vsel %vm337, %v310, 0
      %v342 = vsel %vm337, %v311, 0
      %v345 = vsel %vm337, %v312, 0
      %v348 = vsel %vm337, %v313, 0
      %v351 = vsel %vm337, %v314, 0
      %v354 = vsel %vm337, %v315, 0
      %v357 = vsel %vm337, %v316, 0
      %v360 = vsel %vm337, %v317, 0
      %v363 = vsel %vm337, %v318, 0
      %v366 = vsel %vm337, %v319, 0
      %v369 = vsel %vm337, %v320, 0
      %v372 = vsel %vm337, %v321, 0
      %v375 = vsel %vm337, %v322, 0
      %v378 = vsel %vm337, %v323, 0
      %v381 = vsel %vm337, %v324, 0
      %v384 = vsel %vm337, %v325, 0
      %386 = vmatprep.subr.mxu0 0.0
      %387 = vmatpush1.msra.mxu0 %v326
      %388 = vmatprep.subr.mxu0 0.0
      %389 = vmatpush1.msra.mxu0 %v327
      %390 = vmatprep.subr.mxu0 0.0
      %391 = vmatpush1.msra.mxu0 %v328
      %392 = vmatprep.subr.mxu0 0.0
      %393 = vmatpush1.msra.mxu0 %v329
      %394 = vmatprep.subr.mxu0 0.0
      %395 = vmatpush1.msra.mxu0 0.0
      %396 = vmatprep.subr.mxu0 0.0
      %397 = vmatpush1.msra.mxu0 0.0
      %398 = vmatprep.subr.mxu0 0.0
      %399 = vmatpush1.msra.mxu0 0.0
      %400 = vmatprep.subr.mxu0 0.0
      %401 = vmatpush1.msra.mxu0 0.0
      %402 = vmatprep.subr.mxu0 0.0
      %403 = vmatpush1.msra.mxu0 0.0
      %404 = vmatprep.subr.mxu0 0.0
      %405 = vmatpush1.msra.mxu0 0.0
      %406 = vmatprep.subr.mxu0 0.0
      %407 = vmatpush1.msra.mxu0 0.0
      %408 = vmatprep.subr.mxu0 0.0
      %409 = vmatpush1.msra.mxu0 0.0
      %410 = vmatprep.subr.mxu0 0.0
      %411 = vmatpush1.msra.mxu0 0.0
      %412 = vmatprep.subr.mxu0 0.0
      %413 = vmatpush1.msra.mxu0 0.0
      %414 = vmatprep.subr.mxu0 0.0
      %415 = vmatpush1.msra.mxu0 0.0
      %416 = vmatprep.subr.mxu0 0.0
      %417 = vmatpush1.msra.mxu0 0.0
      %418 = vmatprep.subr.mxu0 0.0
      %419 = vmatpush1.msra.mxu0 0.0
      %420 = vmatprep.subr.mxu0 0.0
      %421 = vmatpush1.msra.mxu0 0.0
      %422 = vmatprep.subr.mxu0 0.0
      %423 = vmatpush1.msra.mxu0 0.0
      %424 = vmatprep.subr.mxu0 0.0
      %425 = vmatpush1.msra.mxu0 0.0
      %426 = vmatprep.subr.mxu0 0.0
      %427 = vmatpush1.msra.mxu0 0.0
      %428 = vmatprep.subr.mxu0 0.0
      %429 = vmatpush1.msra.mxu0 0.0
      %430 = vmatprep.subr.mxu0 0.0
      %431 = vmatpush1.msra.mxu0 0.0
      %432 = vmatprep.subr.mxu0 0.0
      %433 = vmatpush1.msra.mxu0 0.0
      %434 = vmatprep.subr.mxu0 0.0
      %435 = vmatpush1.msra.mxu0 0.0
      %436 = vmatprep.subr.mxu0 0.0
      %437 = vmatpush1.msra.mxu0 0.0
      %438 = vmatprep.subr.mxu0 0.0
      %439 = vmatpush1.msra.mxu0 0.0
      %440 = vmatprep.subr.mxu0 0.0
      %441 = vmatpush1.msra.mxu0 0.0
      %442 = vmatprep.subr.mxu0 0.0
      %443 = vmatpush1.msra.mxu0 0.0
      %444 = vmatprep.subr.mxu0 0.0
      %445 = vmatpush1.msra.mxu0 0.0
      %446 = vmatprep.subr.mxu0 0.0
      %447 = vmatpush1.msra.mxu0 0.0
      %448 = vmatprep.subr.mxu0 0.0
      %449 = vmatpush1.msra.mxu0 0.0
      %450 = vmatprep.mubr.f32.mxu0 0.0
      %451 = vmatmul.mubr.f32.gmra.mrb[0].mxu0 %v339
      %v452 = vpop.f32.mrb[0].mxu0
      %v453 = vadd.f32 %v335, %v452
      %v454 = vpop.f32.mrb[0].mxu0
      %455 = vmatprep.mubr.f32.mxu0 0.0
      %456 = vmatmul.mubr.f32.gmra.mrb[0].mxu0 %v342
      %v457 = vpop.f32.mrb[0].mxu0
      %v458 = vadd.f32 %v335, %v457
      %v459 = vpop.f32.mrb[0].mxu0
      %460 = vmatprep.mubr.f32.mxu0 0.0
      %461 = vmatmul.mubr.f32.gmra.mrb[0].mxu0 %v345
      %v462 = vpop.f32.mrb[0].mxu0
      %v463 = vadd.f32 %v335, %v462
      %v464 = vpop.f32.mrb[0].mxu0
      %465 = vmatprep.mubr.f32.mxu0 0.0
      %466 = vmatmul.mubr.f32.gmra.mrb[0].mxu0 %v348
      %v467 = vpop.f32.mrb[0].mxu0
      %v468 = vadd.f32 %v335, %v467
      %v469 = vpop.f32.mrb[0].mxu0
      %470 = vmatprep.mubr.f32.mxu0 0.0
      %471 = vmatmul.mubr.f32.gmra.mrb[0].mxu0 %v351
      %v472 = vpop.f32.mrb[0].mxu0
      %v473 = vadd.f32 %v335, %v472
      %v474 = vpop.f32.mrb[0].mxu0
      %475 = vmatprep.mubr.f32.mxu0 0.0
      %476 = vmatmul.mubr.f32.gmra.mrb[0].mxu0 %v354
      %v477 = vpop.f32.mrb[0].mxu0
      %v478 = vadd.f32 %v335, %v477
      %v479 = vpop.f32.mrb[0].mxu0
      %480 = vmatprep.mubr.f32.mxu0 0.0
      %481 = vmatmul.mubr.f32.gmra.mrb[0].mxu0 %v357
      %v482 = vpop.f32.mrb[0].mxu0
      %v483 = vadd.f32 %v335, %v482
      %v484 = vpop.f32.mrb[0].mxu0
      %485 = vmatprep.mubr.f32.mxu0 0.0
      %486 = vmatmul.mubr.f32.gmra.mrb[0].mxu0 %v360
      %v487 = vpop.f32.mrb[0].mxu0
      %v488 = vadd.f32 %v335, %v487
      %v489 = vpop.f32.mrb[0].mxu0
      %490 = vmatprep.mubr.f32.mxu0 0.0
      %491 = vmatmul.mubr.f32.gmra.mrb[0].mxu0 %v363
      %v492 = vpop.f32.mrb[0].mxu0
      %v493 = vadd.f32 %v335, %v492
      %v494 = vpop.f32.mrb[0].mxu0
      %495 = vmatprep.mubr.f32.mxu0 0.0
      %496 = vmatmul.mubr.f32.gmra.mrb[0].mxu0 %v366
      %v497 = vpop.f32.mrb[0].mxu0
      %v498 = vadd.f32 %v335, %v497
      %v499 = vpop.f32.mrb[0].mxu0
      %500 = vmatprep.mubr.f32.mxu0 0.0
      %501 = vmatmul.mubr.f32.gmra.mrb[0].mxu0 %v369
      %v502 = vpop.f32.mrb[0].mxu0
      %v503 = vadd.f32 %v335, %v502
      %v504 = vpop.f32.mrb[0].mxu0
      %505 = vmatprep.mubr.f32.mxu0 0.0
      %506 = vmatmul.mubr.f32.gmra.mrb[0].mxu0 %v372
      %v507 = vpop.f32.mrb[0].mxu0
      %v508 = vadd.f32 %v335, %v507
      %v509 = vpop.f32.mrb[0].mxu0
      %510 = vmatprep.mubr.f32.mxu0 0.0
      %511 = vmatmul.mubr.f32.gmra.mrb[0].mxu0 %v375
      %v512 = vpop.f32.mrb[0].mxu0
      %v513 = vadd.f32 %v335, %v512
      %v514 = vpop.f32.mrb[0].mxu0
      %515 = vmatprep.mubr.f32.mxu0 0.0
      %516 = vmatmul.mubr.f32.gmra.mrb[0].mxu0 %v378
      %v517 = vpop.f32.mrb[0].mxu0
      %v518 = vadd.f32 %v335, %v517
      %v519 = vpop.f32.mrb[0].mxu0
      %520 = vmatprep.mubr.f32.mxu0 0.0
      %521 = vmatmul.mubr.f32.gmra.mrb[0].mxu0 %v381
      %v522 = vpop.f32.mrb[0].mxu0
      %v523 = vadd.f32 %v335, %v522
      %v524 = vpop.f32.mrb[0].mxu0
      %525 = vmatprep.mubr.f32.mxu0 0.0
      %526 = vmatmul.mubr.f32.gmra.mrb[0].mxu0 %v384
      %v527 = vpop.f32.mrb[0].mxu0
      %v528 = vadd.f32 %v335, %v527
      %v529 = vpop.f32.mrb[0].mxu0
      %530 = vdwg.mxu0
      %v531 = vmax.f32 %v453, 0.0
      %v532 = vmax.f32 %v458, 0.0
      %v533 = vmax.f32 %v463, 0.0
      %v534 = vmax.f32 %v468, 0.0
      %v535 = vmax.f32 %v473, 0.0
      %v536 = vmax.f32 %v478, 0.0
      %v537 = vmax.f32 %v483, 0.0
      %v538 = vmax.f32 %v488, 0.0
      %v539 = vmax.f32 %v493, 0.0
      %v540 = vmax.f32 %v498, 0.0
      %v541 = vmax.f32 %v503, 0.0
      %v542 = vmax.f32 %v508, 0.0
      %v543 = vmax.f32 %v513, 0.0
      %v544 = vmax.f32 %v518, 0.0
      %v545 = vmax.f32 %v523, 0.0
      %v546 = vmax.f32 %v528, 0.0
      %v547 = vld [vmem:[%s3] sm:$0xff]
      %v548 = vld [vmem:[%s3 + $0x8] sm:$0xff]
      %v549 = vld [vmem:[%s4] sm:$0x1]
      %v551 = vlaneseq
      %v552 = vshrl.u32 %v551, 7
      %v553 = vsub.s32 0, %v552
      %v554 = vrot.slane %v549, %v553
      %vm556 = vcmask 130048
      %v558 = vsel %vm556, %v531, 0
      %v561 = vsel %vm556, %v532, 0
      %v564 = vsel %vm556, %v533, 0
      %v567 = vsel %vm556, %v534, 0
      %v570 = vsel %vm556, %v535, 0
      %v573 = vsel %vm556, %v536, 0
      %v576 = vsel %vm556, %v537, 0
      %v579 = vsel %vm556, %v538, 0
      %v582 = vsel %vm556, %v539, 0
      %v585 = vsel %vm556, %v540, 0
      %v588 = vsel %vm556, %v541, 0
      %v591 = vsel %vm556, %v542, 0
      %v594 = vsel %vm556, %v543, 0
      %v597 = vsel %vm556, %v544, 0
      %v600 = vsel %vm556, %v545, 0
      %v603 = vsel %vm556, %v546, 0
      %605 = vmatprep.subr.mxu0 0.0
      %606 = vmatpush1.msra.mxu0 %v547
      %607 = vmatprep.subr.mxu0 0.0
      %608 = vmatpush1.msra.mxu0 %v548
      %609 = vmatprep.subr.mxu0 0.0
      %610 = vmatpush1.msra.mxu0 0.0
      %611 = vmatprep.subr.mxu0 0.0
      %612 = vmatpush1.msra.mxu0 0.0
      %613 = vmatprep.subr.mxu0 0.0
      %614 = vmatpush1.msra.mxu0 0.0
      %615 = vmatprep.subr.mxu0 0.0
      %616 = vmatpush1.msra.mxu0 0.0
      %617 = vmatprep.subr.mxu0 0.0
      %618 = vmatpush1.msra.mxu0 0.0
      %619 = vmatprep.subr.mxu0 0.0
      %620 = vmatpush1.msra.mxu0 0.0
      %621 = vmatprep.subr.mxu0 0.0
      %622 = vmatpush1.msra.mxu0 0.0
      %623 = vmatprep.subr.mxu0 0.0
      %624 = vmatpush1.msra.mxu0 0.0
      %625 = vmatprep.subr.mxu0 0.0
      %626 = vmatpush1.msra.mxu0 0.0
      %627 = vmatprep.subr.mxu0 0.0
      %628 = vmatpush1.msra.mxu0 0.0
      %629 = vmatprep.subr.mxu0 0.0
      %630 = vmatpush1.msra.mxu0 0.0
      %631 = vmatprep.subr.mxu0 0.0
      %632 = vmatpush1.msra.mxu0 0.0
      %633 = vmatprep.subr.mxu0 0.0
      %634 = vmatpush1.msra.mxu0 0.0
      %635 = vmatprep.subr.mxu0 0.0
      %636 = vmatpush1.msra.mxu0 0.0
      %637 = vmatprep.subr.mxu0 0.0
      %638 = vmatpush1.msra.mxu0 0.0
      %639 = vmatprep.subr.mxu0 0.0
      %640 = vmatpush1.msra.mxu0 0.0
      %641 = vmatprep.subr.mxu0 0.0
      %642 = vmatpush1.msra.mxu0 0.0
      %643 = vmatprep.subr.mxu0 0.0
      %644 = vmatpush1.msra.mxu0 0.0
      %645 = vmatprep.subr.mxu0 0.0
      %646 = vmatpush1.msra.mxu0 0.0
      %647 = vmatprep.subr.mxu0 0.0
      %648 = vmatpush1.msra.mxu0 0.0
      %649 = vmatprep.subr.mxu0 0.0
      %650 = vmatpush1.msra.mxu0 0.0
      %651 = vmatprep.subr.mxu0 0.0
      %652 = vmatpush1.msra.mxu0 0.0
      %653 = vmatprep.subr.mxu0 0.0
      %654 = vmatpush1.msra.mxu0 0.0
      %655 = vmatprep.subr.mxu0 0.0
      %656 = vmatpush1.msra.mxu0 0.0
      %657 = vmatprep.subr.mxu0 0.0
      %658 = vmatpush1.msra.mxu0 0.0
      %659 = vmatprep.subr.mxu0 0.0
      %660 = vmatpush1.msra.mxu0 0.0
      %661 = vmatprep.subr.mxu0 0.0
      %662 = vmatpush1.msra.mxu0 0.0
      %663 = vmatprep.subr.mxu0 0.0
      %664 = vmatpush1.msra.mxu0 0.0
      %665 = vmatprep.subr.mxu0 0.0
      %666 = vmatpush1.msra.mxu0 0.0
      %667 = vmatprep.subr.mxu0 0.0
      %668 = vmatpush1.msra.mxu0 0.0
      %669 = vmatprep.mubr.f32.mxu0 0.0
      %670 = vmatmul.mubr.f32.gmra.mrb[0].mxu0 %v558
      %v671 = vpop.f32.mrb[0].mxu0
      %v672 = vadd.f32 %v554, %v671
      %v673 = vpop.f32.mrb[0].mxu0
      %674 = vmatprep.mubr.f32.mxu0 0.0
      %675 = vmatmul.mubr.f32.gmra.mrb[0].mxu0 %v561
      %v676 = vpop.f32.mrb[0].mxu0
      %v677 = vadd.f32 %v554, %v676
      %v678 = vpop.f32.mrb[0].mxu0
      %679 = vmatprep.mubr.f32.mxu0 0.0
      %680 = vmatmul.mubr.f32.gmra.mrb[0].mxu0 %v564
      %v681 = vpop.f32.mrb[0].mxu0
      %v682 = vadd.f32 %v554, %v681
      %v683 = vpop.f32.mrb[0].mxu0
      %684 = vmatprep.mubr.f32.mxu0 0.0
      %685 = vmatmul.mubr.f32.gmra.mrb[0].mxu0 %v567
      %v686 = vpop.f32.mrb[0].mxu0
      %v687 = vadd.f32 %v554, %v686
      %v688 = vpop.f32.mrb[0].mxu0
      %689 = vmatprep.mubr.f32.mxu0 0.0
      %690 = vmatmul.mubr.f32.gmra.mrb[0].mxu0 %v570
      %v691 = vpop.f32.mrb[0].mxu0
      %v692 = vadd.f32 %v554, %v691
      %v693 = vpop.f32.mrb[0].mxu0
      %694 = vmatprep.mubr.f32.mxu0 0.0
      %695 = vmatmul.mubr.f32.gmra.mrb[0].mxu0 %v573
      %v696 = vpop.f32.mrb[0].mxu0
      %v697 = vadd.f32 %v554, %v696
      %v698 = vpop.f32.mrb[0].mxu0
      %699 = vmatprep.mubr.f32.mxu0 0.0
      %700 = vmatmul.mubr.f32.gmra.mrb[0].mxu0 %v576
      %v701 = vpop.f32.mrb[0].mxu0
      %v702 = vadd.f32 %v554, %v701
      %v703 = vpop.f32.mrb[0].mxu0
      %704 = vmatprep.mubr.f32.mxu0 0.0
      %705 = vmatmul.mubr.f32.gmra.mrb[0].mxu0 %v579
      %v706 = vpop.f32.mrb[0].mxu0
      %v707 = vadd.f32 %v554, %v706
      %v708 = vpop.f32.mrb[0].mxu0
      %709 = vmatprep.mubr.f32.mxu0 0.0
      %710 = vmatmul.mubr.f32.gmra.mrb[0].mxu0 %v582
      %v711 = vpop.f32.mrb[0].mxu0
      %v712 = vadd.f32 %v554, %v711
      %v713 = vpop.f32.mrb[0].mxu0
      %714 = vmatprep.mubr.f32.mxu0 0.0
      %715 = vmatmul.mubr.f32.gmra.mrb[0].mxu0 %v585
      %v716 = vpop.f32.mrb[0].mxu0
      %v717 = vadd.f32 %v554, %v716
      %v718 = vpop.f32.mrb[0].mxu0
      %719 = vmatprep.mubr.f32.mxu0 0.0
      %720 = vmatmul.mubr.f32.gmra.mrb[0].mxu0 %v588
      %v721 = vpop.f32.mrb[0].mxu0
      %v722 = vadd.f32 %v554, %v721
      %v723 = vpop.f32.mrb[0].mxu0
      %724 = vmatprep.mubr.f32.mxu0 0.0
      %725 = vmatmul.mubr.f32.gmra.mrb[0].mxu0 %v591
      %v726 = vpop.f32.mrb[0].mxu0
      %v727 = vadd.f32 %v554, %v726
      %v728 = vpop.f32.mrb[0].mxu0
      %729 = vmatprep.mubr.f32.mxu0 0.0
      %730 = vmatmul.mubr.f32.gmra.mrb[0].mxu0 %v594
      %v731 = vpop.f32.mrb[0].mxu0
      %v732 = vadd.f32 %v554, %v731
      %v733 = vpop.f32.mrb[0].mxu0
      %734 = vmatprep.mubr.f32.mxu0 0.0
      %735 = vmatmul.mubr.f32.gmra.mrb[0].mxu0 %v597
      %v736 = vpop.f32.mrb[0].mxu0
      %v737 = vadd.f32 %v554, %v736
      %v738 = vpop.f32.mrb[0].mxu0
      %739 = vmatprep.mubr.f32.mxu0 0.0
      %740 = vmatmul.mubr.f32.gmra.mrb[0].mxu0 %v600
      %v741 = vpop.f32.mrb[0].mxu0
      %v742 = vadd.f32 %v554, %v741
      %v743 = vpop.f32.mrb[0].mxu0
      %744 = vmatprep.mubr.f32.mxu0 0.0
      %745 = vmatmul.mubr.f32.gmra.mrb[0].mxu0 %v603
      %v746 = vpop.f32.mrb[0].mxu0
      %v747 = vadd.f32 %v554, %v746
      %v748 = vpop.f32.mrb[0].mxu0
      %749 = vdwg.mxu0
      %v750 = vmax.f32 %v672, 0.0
      %v751 = vmax.f32 %v677, 0.0
      %v752 = vmax.f32 %v682, 0.0
      %v753 = vmax.f32 %v687, 0.0
      %v754 = vmax.f32 %v692, 0.0
      %v755 = vmax.f32 %v697, 0.0
      %v756 = vmax.f32 %v702, 0.0
      %v757 = vmax.f32 %v707, 0.0
      %v758 = vmax.f32 %v712, 0.0
      %v759 = vmax.f32 %v717, 0.0
      %v760 = vmax.f32 %v722, 0.0
      %v761 = vmax.f32 %v727, 0.0
      %v762 = vmax.f32 %v732, 0.0
      %v763 = vmax.f32 %v737, 0.0
      %v764 = vmax.f32 %v742, 0.0
      %v765 = vmax.f32 %v747, 0.0
      %v766 = vld [vmem:[%s5] sm:$0xff]
      %v767 = vld [vmem:[%s5 + $0x8] sm:$0xff]
      %v768 = vld [vmem:[%s6] sm:$0x1]
      %v770 = vlaneseq
      %v771 = vshrl.u32 %v770, 7
      %v772 = vsub.s32 0, %v771
      %v773 = vrot.slane %v768, %v772
      %v776 = vsel %vm556, %v750, 0
      %v779 = vsel %vm556, %v751, 0
      %v782 = vsel %vm556, %v752, 0
      %v785 = vsel %vm556, %v753, 0
      %v788 = vsel %vm556, %v754, 0
      %v791 = vsel %vm556, %v755, 0
      %v794 = vsel %vm556, %v756, 0
      %v797 = vsel %vm556, %v757, 0
      %v800 = vsel %vm556, %v758, 0
      %v803 = vsel %vm556, %v759, 0
      %v806 = vsel %vm556, %v760, 0
      %v809 = vsel %vm556, %v761, 0
      %v812 = vsel %vm556, %v762, 0
      %v815 = vsel %vm556, %v763, 0
      %v818 = vsel %vm556, %v764, 0
      %v821 = vsel %vm556, %v765, 0
      %823 = vmatprep.subr.mxu0 0.0
      %824 = vmatpush1.msra.mxu0 %v766
      %825 = vmatprep.subr.mxu0 0.0
      %826 = vmatpush1.msra.mxu0 %v767
      %827 = vmatprep.subr.mxu0 0.0
      %828 = vmatpush1.msra.mxu0 0.0
      %829 = vmatprep.subr.mxu0 0.0
      %830 = vmatpush1.msra.mxu0 0.0
      %831 = vmatprep.subr.mxu0 0.0
      %832 = vmatpush1.msra.mxu0 0.0
      %833 = vmatprep.subr.mxu0 0.0
      %834 = vmatpush1.msra.mxu0 0.0
      %835 = vmatprep.subr.mxu0 0.0
      %836 = vmatpush1.msra.mxu0 0.0
      %837 = vmatprep.subr.mxu0 0.0
      %838 = vmatpush1.msra.mxu0 0.0
      %839 = vmatprep.subr.mxu0 0.0
      %840 = vmatpush1.msra.mxu0 0.0
      %841 = vmatprep.subr.mxu0 0.0
      %842 = vmatpush1.msra.mxu0 0.0
      %843 = vmatprep.subr.mxu0 0.0
      %844 = vmatpush1.msra.mxu0 0.0
      %845 = vmatprep.subr.mxu0 0.0
      %846 = vmatpush1.msra.mxu0 0.0
      %847 = vmatprep.subr.mxu0 0.0
      %848 = vmatpush1.msra.mxu0 0.0
      %849 = vmatprep.subr.mxu0 0.0
      %850 = vmatpush1.msra.mxu0 0.0
      %851 = vmatprep.subr.mxu0 0.0
      %852 = vmatpush1.msra.mxu0 0.0
      %853 = vmatprep.subr.mxu0 0.0
      %854 = vmatpush1.msra.mxu0 0.0
      %855 = vmatprep.subr.mxu0 0.0
      %856 = vmatpush1.msra.mxu0 0.0
      %857 = vmatprep.subr.mxu0 0.0
      %858 = vmatpush1.msra.mxu0 0.0
      %859 = vmatprep.subr.mxu0 0.0
      %860 = vmatpush1.msra.mxu0 0.0
      %861 = vmatprep.subr.mxu0 0.0
      %862 = vmatpush1.msra.mxu0 0.0
      %863 = vmatprep.subr.mxu0 0.0
      %864 = vmatpush1.msra.mxu0 0.0
      %865 = vmatprep.subr.mxu0 0.0
      %866 = vmatpush1.msra.mxu0 0.0
      %867 = vmatprep.subr.mxu0 0.0
      %868 = vmatpush1.msra.mxu0 0.0
      %869 = vmatprep.subr.mxu0 0.0
      %870 = vmatpush1.msra.mxu0 0.0
      %871 = vmatprep.subr.mxu0 0.0
      %872 = vmatpush1.msra.mxu0 0.0
      %873 = vmatprep.subr.mxu0 0.0
      %874 = vmatpush1.msra.mxu0 0.0
      %875 = vmatprep.subr.mxu0 0.0
      %876 = vmatpush1.msra.mxu0 0.0
      %877 = vmatprep.subr.mxu0 0.0
      %878 = vmatpush1.msra.mxu0 0.0
      %879 = vmatprep.subr.mxu0 0.0
      %880 = vmatpush1.msra.mxu0 0.0
      %881 = vmatprep.subr.mxu0 0.0
      %882 = vmatpush1.msra.mxu0 0.0
      %883 = vmatprep.subr.mxu0 0.0
      %884 = vmatpush1.msra.mxu0 0.0
      %885 = vmatprep.subr.mxu0 0.0
      %886 = vmatpush1.msra.mxu0 0.0
      %887 = vmatprep.mubr.f32.mxu0 0.0
      %888 = vmatmul.mubr.f32.gmra.mrb[0].mxu0 %v776
      %v889 = vpop.f32.mrb[0].mxu0
      %v890 = vadd.f32 %v773, %v889
      %v891 = vpop.f32.mrb[0].mxu0
      %892 = vmatprep.mubr.f32.mxu0 0.0
      %893 = vmatmul.mubr.f32.gmra.mrb[0].mxu0 %v779
      %v894 = vpop.f32.mrb[0].mxu0
      %v895 = vadd.f32 %v773, %v894
      %v896 = vpop.f32.mrb[0].mxu0
      %897 = vmatprep.mubr.f32.mxu0 0.0
      %898 = vmatmul.mubr.f32.gmra.mrb[0].mxu0 %v782
      %v899 = vpop.f32.mrb[0].mxu0
      %v900 = vadd.f32 %v773, %v899
      %v901 = vpop.f32.mrb[0].mxu0
      %902 = vmatprep.mubr.f32.mxu0 0.0
      %903 = vmatmul.mubr.f32.gmra.mrb[0].mxu0 %v785
      %v904 = vpop.f32.mrb[0].mxu0
      %v905 = vadd.f32 %v773, %v904
      %v906 = vpop.f32.mrb[0].mxu0
      %907 = vmatprep.mubr.f32.mxu0 0.0
      %908 = vmatmul.mubr.f32.gmra.mrb[0].mxu0 %v788
      %v909 = vpop.f32.mrb[0].mxu0
      %v910 = vadd.f32 %v773, %v909
      %v911 = vpop.f32.mrb[0].mxu0
      %912 = vmatprep.mubr.f32.mxu0 0.0
      %913 = vmatmul.mubr.f32.gmra.mrb[0].mxu0 %v791
      %v914 = vpop.f32.mrb[0].mxu0
      %v915 = vadd.f32 %v773, %v914
      %v916 = vpop.f32.mrb[0].mxu0
      %917 = vmatprep.mubr.f32.mxu0 0.0
      %918 = vmatmul.mubr.f32.gmra.mrb[0].mxu0 %v794
      %v919 = vpop.f32.mrb[0].mxu0
      %v920 = vadd.f32 %v773, %v919
      %v921 = vpop.f32.mrb[0].mxu0
      %922 = vmatprep.mubr.f32.mxu0 0.0
      %923 = vmatmul.mubr.f32.gmra.mrb[0].mxu0 %v797
      %v924 = vpop.f32.mrb[0].mxu0
      %v925 = vadd.f32 %v773, %v924
      %v926 = vpop.f32.mrb[0].mxu0
      %927 = vmatprep.mubr.f32.mxu0 0.0
      %928 = vmatmul.mubr.f32.gmra.mrb[0].mxu0 %v800
      %v929 = vpop.f32.mrb[0].mxu0
      %v930 = vadd.f32 %v773, %v929
      %v931 = vpop.f32.mrb[0].mxu0
      %932 = vmatprep.mubr.f32.mxu0 0.0
      %933 = vmatmul.mubr.f32.gmra.mrb[0].mxu0 %v803
      %v934 = vpop.f32.mrb[0].mxu0
      %v935 = vadd.f32 %v773, %v934
      %v936 = vpop.f32.mrb[0].mxu0
      %937 = vmatprep.mubr.f32.mxu0 0.0
      %938 = vmatmul.mubr.f32.gmra.mrb[0].mxu0 %v806
      %v939 = vpop.f32.mrb[0].mxu0
      %v940 = vadd.f32 %v773, %v939
      %v941 = vpop.f32.mrb[0].mxu0
      %942 = vmatprep.mubr.f32.mxu0 0.0
      %943 = vmatmul.mubr.f32.gmra.mrb[0].mxu0 %v809
      %v944 = vpop.f32.mrb[0].mxu0
      %v945 = vadd.f32 %v773, %v944
      %v946 = vpop.f32.mrb[0].mxu0
      %947 = vmatprep.mubr.f32.mxu0 0.0
      %948 = vmatmul.mubr.f32.gmra.mrb[0].mxu0 %v812
      %v949 = vpop.f32.mrb[0].mxu0
      %v950 = vadd.f32 %v773, %v949
      %v951 = vpop.f32.mrb[0].mxu0
      %952 = vmatprep.mubr.f32.mxu0 0.0
      %953 = vmatmul.mubr.f32.gmra.mrb[0].mxu0 %v815
      %v954 = vpop.f32.mrb[0].mxu0
      %v955 = vadd.f32 %v773, %v954
      %v956 = vpop.f32.mrb[0].mxu0
      %957 = vmatprep.mubr.f32.mxu0 0.0
      %958 = vmatmul.mubr.f32.gmra.mrb[0].mxu0 %v818
      %v959 = vpop.f32.mrb[0].mxu0
      %v960 = vadd.f32 %v773, %v959
      %v961 = vpop.f32.mrb[0].mxu0
      %962 = vmatprep.mubr.f32.mxu0 0.0
      %963 = vmatmul.mubr.f32.gmra.mrb[0].mxu0 %v821
      %v964 = vpop.f32.mrb[0].mxu0
      %v965 = vadd.f32 %v773, %v964
      %v966 = vpop.f32.mrb[0].mxu0
      %967 = vdwg.mxu0
      %s968 = sld [smem:[#allocation2]]
      %v969 = vstv %s968
      %v970 = vmul.f32 %v969, %v890
      %v971 = vmul.f32 %v969, %v895
      %v972 = vmul.f32 %v969, %v900
      %v973 = vmul.f32 %v969, %v905
      %v974 = vmul.f32 %v969, %v910
      %v975 = vmul.f32 %v969, %v915
      %v976 = vmul.f32 %v969, %v920
      %v977 = vmul.f32 %v969, %v925
      %v978 = vmul.f32 %v969, %v930
      %v979 = vmul.f32 %v969, %v935
      %v980 = vmul.f32 %v969, %v940
      %v981 = vmul.f32 %v969, %v945
      %v982 = vmul.f32 %v969, %v950
      %v983 = vmul.f32 %v969, %v955
      %v984 = vmul.f32 %v969, %v960
      %v985 = vmul.f32 %v969, %v965
      %v986 = vadd.f32 %v310, %v970
      %v987 = vadd.f32 %v311, %v971
      %v988 = vadd.f32 %v312, %v972
      %v989 = vadd.f32 %v313, %v973
      %v990 = vadd.f32 %v314, %v974
      %v991 = vadd.f32 %v315, %v975
      %v992 = vadd.f32 %v316, %v976
      %v993 = vadd.f32 %v317, %v977
      %v994 = vadd.f32 %v318, %v978
      %v995 = vadd.f32 %v319, %v979
      %v996 = vadd.f32 %v320, %v980
      %v997 = vadd.f32 %v321, %v981
      %v998 = vadd.f32 %v322, %v982
      %v999 = vadd.f32 %v323, %v983
      %v1000 = vadd.f32 %v324, %v984
      %v1001 = vadd.f32 %v325, %v985
      %1002 = vst.msk [vmem:[%s308] sm:$0xff] %vm337, %v986
      %1003 = vst.msk [vmem:[%s308 + $0x8] sm:$0xff] %vm337, %v987
      %1004 = vst.msk [vmem:[%s308 + $0x10] sm:$0xff] %vm337, %v988
      %1005 = vst.msk [vmem:[%s308 + $0x18] sm:$0xff] %vm337, %v989
      %1006 = vst.msk [vmem:[%s308 + $0x20] sm:$0xff] %vm337, %v990
      %1007 = vst.msk [vmem:[%s308 + $0x28] sm:$0xff] %vm337, %v991
      %1008 = vst.msk [vmem:[%s308 + $0x30] sm:$0xff] %vm337, %v992
      %1009 = vst.msk [vmem:[%s308 + $0x38] sm:$0xff] %vm337, %v993
      %1010 = vst.msk [vmem:[%s308 + $0x40] sm:$0xff] %vm337, %v994
      %1011 = vst.msk [vmem:[%s308 + $0x48] sm:$0xff] %vm337, %v995
      %1012 = vst.msk [vmem:[%s308 + $0x50] sm:$0xff] %vm337, %v996
      %1013 = vst.msk [vmem:[%s308 + $0x58] sm:$0xff] %vm337, %v997
      %1014 = vst.msk [vmem:[%s308 + $0x60] sm:$0xff] %vm337, %v998
      %1015 = vst.msk [vmem:[%s308 + $0x68] sm:$0xff] %vm337, %v999
      %1016 = vst.msk [vmem:[%s308 + $0x70] sm:$0xff] %vm337, %v1000
      %1017 = vst.msk [vmem:[%s308 + $0x78] sm:$0xff] %vm337, %v1001
      %s1018 = smul.u32 16, %s20
      %p1019 = scmp.lt.s32.totalorder %s1018, 31
      %s1020 = scalar_select %p1019, %s1018, 31
      %s1021 = smul.addr %s1020, 8
      %s1022 = scalar_lea.vmem %s8, %s1021
      // Predicated region
      $region53: #{tpu_custom_call.1} parent=51 // pred_check
        %p1023 = pneg %p211
      $region54: #{tpu_custom_call.1} parent=51 // pred_check_branch
        %1025 = sbr.rel (%p1023) target = $region56
      $region55: #{tpu_custom_call.1} parent=51 // pred_region
        %s1026 = smul.u32 16, %s20
      $region56: #{tpu_custom_call.1} parent=51 // pred_fallthru
        _
    $region52: #{tpu_custom_call.1} parent=5 // pred_fallthru
      _
    %p1027 = scmp.le.s32.totalorder 2, %s15
    // Predicated region
    $region57: #{tpu_custom_call.1} parent=5 // pred_check
      %p1028 = pneg %p1027
    $region58: #{tpu_custom_call.1} parent=5 // pred_check_branch
      %1030 = sbr.rel (%p1028) target = $region60
    $region59: #{tpu_custom_call.1} parent=5 // pred_region
      %s1031 = ssub.s32 %s15, 2
      // Predicated region
      $region61: #{tpu_custom_call.1} parent=59 // pred_check
        %p1032 = pneg %p217
      $region62: #{tpu_custom_call.1} parent=59 // pred_check_branch
        %1034 = sbr.rel (%p1032) target = $region64
      $region63: #{tpu_custom_call.1} parent=59 // pred_region
        %s1035 = smul.u32 16, %s21
        %p1036 = scmp.lt.s32.totalorder %s1035, 31
        %s1037 = scalar_select %p1036, %s1035, 31
        %s1038 = smul.addr %s1037, 8
        %s1039 = scalar_lea.vmem %s8, %s1038
      $region64: #{tpu_custom_call.1} parent=59 // pred_fallthru
        _
    $region60: #{tpu_custom_call.1} parent=5 // pred_fallthru
      _
  $region6: #{tpu_custom_call.1} parent=0 // loop_footer
    %s19 = sadd.s32 1, %s15
  $region7: #{tpu_custom_call.1} parent=0 // loop_footer_branch
    %14 = sbr.rel target = $region3
  $region8: #{tpu_custom_call.1} parent=0 // loop_exit
    _

</llo_original>
